<compile_context>
chip_gen: v5e
topology: v5e:2x2
jax: 0.10.0
libtpu: 0.0.40
codegen_flags: <defaults>
</compile_context>

<pallas_src>
import functools
import math

import jax
import jax.numpy as jnp
from jax import lax
from jax.experimental import pallas as pl
from jax.experimental.pallas import tpu as pltpu


EPS = 1e-07                      # matches safe_log(z) = log(z + 1e-07)
LOG_EPS = math.log(EPS)

LANEW = 512                      # lane-dense tile width
TARGET_BLOCK_BYTES = 4 * 1024 * 1024   # ~4 MiB per grid step (x2 double-buffered)


def _logaddexp(a, b):
    """Stable log(exp(a) + exp(b)) for finite a, b (plain log(1+x); Mosaic-safe)."""
    m = jnp.maximum(a, b)
    return m + jnp.log(1.0 + jnp.exp(-jnp.abs(a - b)))


def _fe_kernel(z_ref, lj_ref, out_ref, acc_ref, *, n, br, acc_rows, needs_mask):
    # z_ref   : (2, br, LANEW) f32   z1 / z2 lane-dense slabs
    # lj_ref  : (K, br, LANEW) f32   per-flow-step log-det-jacobians
    # out_ref : (8, 128)       f32   total sum (broadcast-filled on the last step)
    # acc_ref : (acc_rows, LANEW) f32 running accumulator (VMEM scratch)
    i = pl.program_id(0)
    nblk = pl.num_programs(0)

    @pl.when(i == 0)
    def _init():
        acc_ref[...] = jnp.zeros_like(acc_ref)

    z1 = z_ref[0]
    z2 = z_ref[1]

    # Ring target density, per sample, on full (br, LANEW) slabs.
    norm = jnp.sqrt(z1 * z1 + z2 * z2)
    az1 = jnp.abs(z1)
    # log(exp(a1) + exp(a2)) with a1 - a2 = 6.25*z1, max(a1, a2) = -0.78125*(|z1|-2)^2.
    log_mix = -0.78125 * (az1 - 2.0) ** 2 + jnp.log(1.0 + jnp.exp(-6.25 * az1))
    u = 3.125 * (norm - 4.0) ** 2 - log_mix          # 0.5/0.4^2 = 3.125
    # safe_log(exp(-u)) = log(exp(-u) + EPS) = logaddexp(-u, log(EPS)), stable.
    log_density = _logaddexp(-u, jnp.float32(LOG_EPS))

    sum_log_jac = jnp.sum(lj_ref[...], axis=0)       # (br, LANEW)
    fe = -sum_log_jac - log_density                  # (br, LANEW)

    def _partial(x):
        # Reduce the block to the small accumulator shape (layout-friendly: splits
        # whole groups of 8 sublanes; pure VALU adds, no XLU until finalize).
        if acc_rows == 8:
            return x.reshape(br // 8, 8, LANEW).sum(axis=0)
        return jnp.sum(x, axis=0, keepdims=True)

    if needs_mask:
        # Only the last block can contain padded zeros / garbage rows; mask it with a
        # select (not a multiply) so NaN/Inf from garbage never reaches the accumulator.
        @pl.when(i == nblk - 1)
        def _masked():
            row = lax.broadcasted_iota(jnp.int32, (br, LANEW), 0)
            lane = lax.broadcasted_iota(jnp.int32, (br, LANEW), 1)
            gidx = (i * br + row) * LANEW + lane
            acc_ref[...] += _partial(jnp.where(gidx < n, fe, 0.0))

        @pl.when(i < nblk - 1)
        def _full():
            acc_ref[...] += _partial(fe)
    else:
        acc_ref[...] += _partial(fe)

    @pl.when(i == nblk - 1)
    def _finalize():
        total = jnp.sum(acc_ref[...])                # single cross-lane reduction at the end
        out_ref[...] = jnp.full(out_ref.shape, total, dtype=jnp.float32)


def free_energy_bound(zk, log_jacobians):
    """zk: [N, 2] f32; log_jacobians: [K, N] f32 (stacked list). Returns scalar f32."""
    zk = jnp.asarray(zk, jnp.float32)
    lj = jnp.asarray(log_jacobians, jnp.float32)
    n, d = zk.shape
    assert d == 2, "ring density expects 2-D latents"
    assert n > 0
    k = lj.shape[0]
    assert lj.shape == (k, n)

    # Lane-align the sample axis.  When n % LANEW == 0 (the common case) this is a free
    # reshape; otherwise a single pad copy (unavoidable to get a lane-dense 2-D layout).
    rows = pl.cdiv(n, LANEW)
    n_pad = rows * LANEW
    pad = n_pad - n

    z_t = zk.T                                       # (2, n) -- tiny
    if pad:
        z_t = jnp.pad(z_t, ((0, 0), (0, pad)))
        lj = jnp.pad(lj, ((0, 0), (0, pad)))
    z_in = z_t.reshape(2, rows, LANEW)
    lj_in = lj.reshape(k, rows, LANEW)

    # Block rows: ~TARGET_BLOCK_BYTES per step across (K+2) lane-dense planes,
    # multiple of 8 sublanes, capped at 512 and at the actual row count.
    br_budget = TARGET_BLOCK_BYTES // ((k + 2) * LANEW * 4)
    br_max = max(8, min(512, (br_budget // 8) * 8))
    if rows >= 8:
        br = min(br_max, (rows // 8) * 8)
        acc_rows = 8
    else:
        br = rows
        acc_rows = 8 if br % 8 == 0 else 1

    nblk = pl.cdiv(rows, br)
    needs_mask = (n_pad != n) or (rows % br != 0)

    kernel = functools.partial(_fe_kernel, n=n, br=br, acc_rows=acc_rows,
                               needs_mask=needs_mask)

    out = pl.pallas_call(
        kernel,
        out_shape=jax.ShapeDtypeStruct((8, 128), jnp.float32),
        grid=(nblk,),
        in_specs=[
            pl.BlockSpec((2, br, LANEW), lambda i: (0, i, 0)),
            pl.BlockSpec((k, br, LANEW), lambda i: (0, i, 0)),
        ],
        out_specs=pl.BlockSpec((8, 128), lambda i: (0, 0)),
        scratch_shapes=[pltpu.VMEM((acc_rows, LANEW), jnp.float32)],
        compiler_params=pltpu.CompilerParams(
            dimension_semantics=("arbitrary",)),
    )(z_in, lj_in)

    return out[0, 0] * (1.0 / n)                     # mean over the true (unpadded) N


def _reference(zk, log_jacobians):
    """Pure-JAX reference mirroring the PyTorch forward exactly."""
    z1 = zk[:, 0]
    z2 = zk[:, 1]
    norm = jnp.sqrt(z1 ** 2 + z2 ** 2)
    exp1 = jnp.exp(-0.5 * ((z1 - 2.0) / 0.8) ** 2)
    exp2 = jnp.exp(-0.5 * ((z1 + 2.0) / 0.8) ** 2)
    u = 0.5 * ((norm - 4.0) / 0.4) ** 2 - jnp.log(exp1 + exp2)
    density = jnp.exp(-u)
    sum_log_jac = jnp.sum(log_jacobians, axis=0)
    return jnp.mean(-sum_log_jac - jnp.log(density + EPS))


if __name__ == "__main__":
    key = jax.random.PRNGKey(0)
    k_z, k_j = jax.random.split(key)

    N = 64   # batch of latent samples
    K = 4    # number of flow steps (length of the log_jacobians list)

    zk = jax.random.normal(k_z, (N, 2), dtype=jnp.float32) * 2.0
    log_jacobians = jax.random.normal(k_j, (K, N), dtype=jnp.float32) * 0.1

    result = jax.block_until_ready(free_energy_bound(zk, log_jacobians))
    ref = _reference(zk, log_jacobians)

    assert jnp.allclose(result, ref, rtol=1e-5, atol=1e-5), (result, ref)
    print("KERNEL_OK")
</pallas_src>

<mosaic_0001>
module attributes {stable_mosaic.version = 11 : i64} {
  func.func @_fe_kernel(%arg0: i32, %arg1: memref<2x1x512xf32, #tpu.memory_space<vmem>>, %arg2: memref<4x1x512xf32, #tpu.memory_space<vmem>>, %arg3: memref<8x128xf32, #tpu.memory_space<vmem>>, %arg4: memref<1x512xf32, #tpu.memory_space<vmem>>) attributes {dimension_semantics = [#tpu.dimension_semantics<arbitrary>], iteration_bounds = array<i64: 1>, scalar_prefetch = 0 : i64, scratch_operands = 1 : i64, tpu.core_type = #tpu.core_type<tc>, window_params = [{transform_indices = @transform_0, window_bounds = array<i64: 2, 1, 512>}, {transform_indices = @transform_1, window_bounds = array<i64: 4, 1, 512>}, {pipeline_mode = #tpu.pipeline_mode<synchronous>, transform_indices = @transform_2, window_bounds = array<i64: 8, 128>}]} {
    %c0_i32 = arith.constant 0 : i32
    %0 = arith.cmpi eq, %arg0, %c0_i32 : i32
    %1 = arith.extui %0 : i1 to i32
    %c0_i32_0 = arith.constant 0 : i32
    %2 = arith.cmpi ne, %1, %c0_i32_0 : i32
    scf.if %2 {
      %cst_26 = arith.constant 0.000000e+00 : f32
      %58 = vector.broadcast %cst_26 : f32 to vector<1x512xf32>
      %c0_27 = arith.constant 0 : index
      %c0_28 = arith.constant 0 : index
      %59 = vector.load %arg4[%c0_27, %c0_28] : memref<1x512xf32, #tpu.memory_space<vmem>>, vector<1x512xf32>
      tpu.vector_store %arg4[%c0_27, %c0_28], %58 {strides = array<i32>} : memref<1x512xf32, #tpu.memory_space<vmem>>, vector<1x512xf32>,
    } else {
    }
    %c0 = arith.constant 0 : index
    %c0_1 = arith.constant 0 : index
    %c0_2 = arith.constant 0 : index
    %3 = vector.load %arg1[%c0, %c0_1, %c0_2] : memref<2x1x512xf32, #tpu.memory_space<vmem>>, vector<1x1x512xf32>
    %4 = vector.shape_cast %3 : vector<1x1x512xf32> to vector<1x512xf32>
    %c1 = arith.constant 1 : index
    %c0_3 = arith.constant 0 : index
    %c0_4 = arith.constant 0 : index
    %5 = vector.load %arg1[%c1, %c0_3, %c0_4] : memref<2x1x512xf32, #tpu.memory_space<vmem>>, vector<1x1x512xf32>
    %6 = vector.shape_cast %5 : vector<1x1x512xf32> to vector<1x512xf32>
    %7 = arith.mulf %4, %4 : vector<1x512xf32>
    %8 = arith.mulf %6, %6 : vector<1x512xf32>
    %9 = arith.addf %7, %8 : vector<1x512xf32>
    %10 = math.sqrt %9 : vector<1x512xf32>
    %11 = math.absf %4 : vector<1x512xf32>
    %cst = arith.constant 2.000000e+00 : f32
    %12 = vector.broadcast %cst : f32 to vector<1x512xf32>
    %13 = arith.subf %11, %12 : vector<1x512xf32>
    %14 = arith.mulf %13, %13 : vector<1x512xf32>
    %cst_5 = arith.constant -7.812500e-01 : f32
    %15 = vector.broadcast %cst_5 : f32 to vector<1x512xf32>
    %16 = arith.mulf %15, %14 : vector<1x512xf32>
    %cst_6 = arith.constant -6.250000e+00 : f32
    %17 = vector.broadcast %cst_6 : f32 to vector<1x512xf32>
    %18 = arith.mulf %17, %11 : vector<1x512xf32>
    %19 = math.exp %18 : vector<1x512xf32>
    %cst_7 = arith.constant 1.000000e+00 : f32
    %20 = vector.broadcast %cst_7 : f32 to vector<1x512xf32>
    %21 = arith.addf %20, %19 : vector<1x512xf32>
    %22 = math.log %21 : vector<1x512xf32>
    %23 = arith.addf %16, %22 : vector<1x512xf32>
    %cst_8 = arith.constant 4.000000e+00 : f32
    %24 = vector.broadcast %cst_8 : f32 to vector<1x512xf32>
    %25 = arith.subf %10, %24 : vector<1x512xf32>
    %26 = arith.mulf %25, %25 : vector<1x512xf32>
    %cst_9 = arith.constant 3.125000e+00 : f32
    %27 = vector.broadcast %cst_9 : f32 to vector<1x512xf32>
    %28 = arith.mulf %27, %26 : vector<1x512xf32>
    %29 = arith.subf %28, %23 : vector<1x512xf32>
    %cst_10 = arith.constant 0.000000e+00 : f32
    %30 = vector.broadcast %cst_10 : f32 to vector<1x512xf32>
    %31 = arith.subf %30, %29 : vector<1x512xf32>
    %cst_11 = arith.constant -16.1180954 : f32
    %32 = vector.broadcast %cst_11 : f32 to vector<1x512xf32>
    %33 = arith.maximumf %31, %32 : vector<1x512xf32>
    %cst_12 = arith.constant -16.1180954 : f32
    %34 = vector.broadcast %cst_12 : f32 to vector<1x512xf32>
    %35 = arith.subf %31, %34 : vector<1x512xf32>
    %36 = math.absf %35 : vector<1x512xf32>
    %cst_13 = arith.constant 0.000000e+00 : f32
    %37 = vector.broadcast %cst_13 : f32 to vector<1x512xf32>
    %38 = arith.subf %37, %36 : vector<1x512xf32>
    %39 = math.exp %38 : vector<1x512xf32>
    %cst_14 = arith.constant 1.000000e+00 : f32
    %40 = vector.broadcast %cst_14 : f32 to vector<1x512xf32>
    %41 = arith.addf %40, %39 : vector<1x512xf32>
    %42 = math.log %41 : vector<1x512xf32>
    %43 = arith.addf %33, %42 : vector<1x512xf32>
    %c0_15 = arith.constant 0 : index
    %c0_16 = arith.constant 0 : index
    %c0_17 = arith.constant 0 : index
    %44 = vector.load %arg2[%c0_15, %c0_16, %c0_17] : memref<4x1x512xf32, #tpu.memory_space<vmem>>, vector<4x1x512xf32>
    %cst_18 = arith.constant dense<0.000000e+00> : vector<1x512xf32>
    %45 = vector.multi_reduction <add>, %44, %cst_18 [0] : vector<4x1x512xf32> to vector<1x512xf32>
    %cst_19 = arith.constant 0.000000e+00 : f32
    %46 = vector.broadcast %cst_19 : f32 to vector<1x512xf32>
    %47 = arith.subf %46, %45 : vector<1x512xf32>
    %48 = arith.subf %47, %43 : vector<1x512xf32>
    %c0_i32_20 = arith.constant 0 : i32
    %49 = arith.cmpi eq, %arg0, %c0_i32_20 : i32
    %50 = arith.extui %49 : i1 to i32
    %c0_i32_21 = arith.constant 0 : i32
    %51 = arith.cmpi ne, %50, %c0_i32_21 : i32
    scf.if %51 {
      %58 = tpu.iota {dimensions = array<i32: 0>} : vector<1x512xi32>
      %59 = tpu.iota {dimensions = array<i32: 1>} : vector<1x512xi32>
      %c1_i32 = arith.constant 1 : i32
      %60 = arith.muli %arg0, %c1_i32 : i32
      %61 = vector.broadcast %60 : i32 to vector<1x512xi32>
      %62 = arith.addi %61, %58 : vector<1x512xi32>
      %c512_i32 = arith.constant 512 : i32
      %63 = vector.broadcast %c512_i32 : i32 to vector<1x512xi32>
      %64 = arith.muli %62, %63 : vector<1x512xi32>
      %65 = arith.addi %64, %59 : vector<1x512xi32>
      %c0_26 = arith.constant 0 : index
      %c0_27 = arith.constant 0 : index
      %66 = vector.load %arg4[%c0_26, %c0_27] : memref<1x512xf32, #tpu.memory_space<vmem>>, vector<1x512xf32>
      %c64_i32 = arith.constant 64 : i32
      %67 = vector.broadcast %c64_i32 : i32 to vector<1x512xi32>
      %68 = arith.cmpi slt, %65, %67 : vector<1x512xi32>
      %cst_28 = arith.constant 0.000000e+00 : f32
      %69 = vector.broadcast %cst_28 : f32 to vector<1x512xf32>
      %70 = arith.select %68, %48, %69 : vector<1x512xi1>, vector<1x512xf32>
      %cst_29 = arith.constant dense<0.000000e+00> : vector<512xf32>
      %71 = vector.multi_reduction <add>, %70, %cst_29 [0] : vector<1x512xf32> to vector<512xf32>
      %72 = vector.shape_cast %71 : vector<512xf32> to vector<1x512xf32>
      %73 = arith.addf %66, %72 : vector<1x512xf32>
      %c0_30 = arith.constant 0 : index
      %c0_31 = arith.constant 0 : index
      %74 = vector.load %arg4[%c0_30, %c0_31] : memref<1x512xf32, #tpu.memory_space<vmem>>, vector<1x512xf32>
      tpu.vector_store %arg4[%c0_30, %c0_31], %73 {strides = array<i32>} : memref<1x512xf32, #tpu.memory_space<vmem>>, vector<1x512xf32>,
    } else {
    }
    %c0_i32_22 = arith.constant 0 : i32
    %52 = arith.cmpi slt, %arg0, %c0_i32_22 : i32
    %53 = arith.extui %52 : i1 to i32
    %c0_i32_23 = arith.constant 0 : i32
    %54 = arith.cmpi ne, %53, %c0_i32_23 : i32
    scf.if %54 {
      %c0_26 = arith.constant 0 : index
      %c0_27 = arith.constant 0 : index
      %58 = vector.load %arg4[%c0_26, %c0_27] : memref<1x512xf32, #tpu.memory_space<vmem>>, vector<1x512xf32>
      %cst_28 = arith.constant dense<0.000000e+00> : vector<512xf32>
      %59 = vector.multi_reduction <add>, %48, %cst_28 [0] : vector<1x512xf32> to vector<512xf32>
      %60 = vector.shape_cast %59 : vector<512xf32> to vector<1x512xf32>
      %61 = arith.addf %58, %60 : vector<1x512xf32>
      %c0_29 = arith.constant 0 : index
      %c0_30 = arith.constant 0 : index
      %62 = vector.load %arg4[%c0_29, %c0_30] : memref<1x512xf32, #tpu.memory_space<vmem>>, vector<1x512xf32>
      tpu.vector_store %arg4[%c0_29, %c0_30], %61 {strides = array<i32>} : memref<1x512xf32, #tpu.memory_space<vmem>>, vector<1x512xf32>,
    } else {
    }
    %c0_i32_24 = arith.constant 0 : i32
    %55 = arith.cmpi eq, %arg0, %c0_i32_24 : i32
    %56 = arith.extui %55 : i1 to i32
    %c0_i32_25 = arith.constant 0 : i32
    %57 = arith.cmpi ne, %56, %c0_i32_25 : i32
    scf.if %57 {
      %c0_26 = arith.constant 0 : index
      %c0_27 = arith.constant 0 : index
      %58 = vector.load %arg4[%c0_26, %c0_27] : memref<1x512xf32, #tpu.memory_space<vmem>>, vector<1x512xf32>
      %59 = vector.shape_cast %58 : vector<1x512xf32> to vector<1x1x512xf32>
      %cst_28 = arith.constant dense<0.000000e+00> : vector<1xf32>
      %60 = vector.multi_reduction <add>, %59, %cst_28 [1, 2] : vector<1x1x512xf32> to vector<1xf32>
      %61 = vector.shape_cast %60 : vector<1xf32> to vector<1x1x1xf32>
      %62 = vector.extract %61[0, 0, 0] : f32 from vector<1x1x1xf32>
      %63 = vector.broadcast %62 : f32 to vector<8x128xf32>
      %c0_29 = arith.constant 0 : index
      %c0_30 = arith.constant 0 : index
      %64 = vector.load %arg3[%c0_29, %c0_30] : memref<8x128xf32, #tpu.memory_space<vmem>>, vector<8x128xf32>
      tpu.vector_store %arg3[%c0_29, %c0_30], %63 {strides = array<i32>} : memref<8x128xf32, #tpu.memory_space<vmem>>, vector<8x128xf32>,
    } else {
    }
    return
  }
  func.func @transform_0(%arg0: i32) -> (i32, i32, i32) {
    %c0_i32 = arith.constant 0 : i32
    %c0_i32_0 = arith.constant 0 : i32
    %c0_i32_1 = arith.constant 0 : i32
    return %c0_i32, %arg0, %c0_i32_0 : i32, i32, i32
  }
  func.func @transform_1(%arg0: i32) -> (i32, i32, i32) {
    %c0_i32 = arith.constant 0 : i32
    %c0_i32_0 = arith.constant 0 : i32
    %c0_i32_1 = arith.constant 0 : i32
    return %c0_i32, %arg0, %c0_i32_0 : i32, i32, i32
  }
  func.func @transform_2(%arg0: i32) -> (i32, i32) {
    %c0_i32 = arith.constant 0 : i32
    %c0_i32_0 = arith.constant 0 : i32
    %c0_i32_1 = arith.constant 0 : i32
    return %c0_i32, %c0_i32_0 : i32, i32
  }
}

</mosaic_0001>

<llo_original>
// kernel: tpu_custom_call.1
$region0: #{tpu_custom_call.1}
  #allocation0 [shape = 'u32[]', space=smem, size = 0x4, offset = 0x4, fixed_abs, tag = 'smem constant byte address 0x4 - core index']
  #allocation1 [shape = 'u32[72,128]{1,0:T(1,128)}', space=vmem, size = 0x9000, scoped, tag = 'internal scratch']
  #allocation2 [shape = 'f32[1,512]{1,0:T(1,128)}', space=vmem, size = 0x800, scoped, tag = 'scratch operand']
  %s0 = inlined_call_operand.hbm [shape: f32[2,1,512], index: 0, kind: input, shape index: {}]
  %s1 = inlined_call_operand.hbm [shape: f32[4,1,512], index: 1, kind: input, shape index: {}]
  %s2 = inlined_call_operand.hbm [shape: f32[8,128], index: 2, kind: output, shape index: {}]
  %s3 = sld [smem:[#allocation0]]
  $region42: #{tpu_custom_call.1} parent=0
    _
  %s5 = ssub.s32 1, %s3
  %s6 = scalar_select 0, %s5, %s3
  $region1: #{tpu_custom_call.1} parent=0
    #allocation3 [shape = 'u8[4096]{0}', space=vmem, size = 0x1000, scoped, tag = 'input window, operand 0, single buffered']
    #allocation4 [shape = 's32[1]{0}', space=sflag, size = 0x4, scoped, tag = 'scoped memory for tpu_custom_call.1']
    #allocation5 [shape = 's32[1]{0}', space=sflag, size = 0x4, scoped, tag = 'scoped memory for tpu_custom_call.1']
    #allocation6 [shape = 'u8[8192]{0}', space=vmem, size = 0x2000, scoped, tag = 'input window, operand 1, single buffered']
    #allocation7 [shape = 's32[1]{0}', space=sflag, size = 0x4, scoped, tag = 'scoped memory for tpu_custom_call.1']
    #allocation8 [shape = 'u8[4096]{0}', space=vmem, size = 0x1000, scoped, tag = 'output window, operand 0, single buffered']
    %7 = vsyncpa [#allocation4], 0
    %8 = vsyncpa [#allocation7], 0
    %9 = vsyncpa [#allocation5], 0
    // Predicated region
    $region2: #{tpu_custom_call.1} parent=1 // pred_check
      _
    $region3: #{tpu_custom_call.1} parent=1 // pred_check_branch
      %11 = sbr.rel (0) target = $region5
    $region4: #{tpu_custom_call.1} parent=1 // pred_region
      %13 = vsyncadd [#allocation4], 0
      %s14 = sshll.u32 %s0, 4
      %s15 = int_to_ptr.hbm [resolvable:$true] %s14
      %s16 = sshll.u32 [#allocation3], 4
      %s17 = int_to_ptr.vmem [resolvable:$true] %s16
      %22 = dma.hbm_to_vmem [thread:$0]  %s15, 128, %s17, [#allocation4], 64, 64, 4
    $region5: #{tpu_custom_call.1} parent=1 // pred_fallthru
      _
    // Predicated region
    $region6: #{tpu_custom_call.1} parent=1 // pred_check
      _
    $region7: #{tpu_custom_call.1} parent=1 // pred_check_branch
      %24 = sbr.rel (0) target = $region9
    $region8: #{tpu_custom_call.1} parent=1 // pred_region
      %26 = vsyncadd [#allocation7], 0
      %s27 = sshll.u32 %s1, 4
      %s28 = int_to_ptr.hbm [resolvable:$true] %s27
      %s29 = sshll.u32 [#allocation6], 4
      %s30 = int_to_ptr.vmem [resolvable:$true] %s29
      %35 = dma.hbm_to_vmem [thread:$0]  %s28, 256, %s30, [#allocation7], 64, 64, 4
    $region9: #{tpu_custom_call.1} parent=1 // pred_fallthru
      _
    // Predicated region
    $region10: #{tpu_custom_call.1} parent=1 // pred_check
      _
    $region11: #{tpu_custom_call.1} parent=1 // pred_check_branch
      %37 = sbr.rel (0) target = $region13
    $region12: #{tpu_custom_call.1} parent=1 // pred_region
      %39 = dma.done [#allocation4], 128
    $region13: #{tpu_custom_call.1} parent=1 // pred_fallthru
      _
    // Predicated region
    $region14: #{tpu_custom_call.1} parent=1 // pred_check
      _
    $region15: #{tpu_custom_call.1} parent=1 // pred_check_branch
      %41 = sbr.rel (0) target = $region17
    $region16: #{tpu_custom_call.1} parent=1 // pred_region
      %43 = dma.done [#allocation7], 256
    $region17: #{tpu_custom_call.1} parent=1 // pred_fallthru
      _
    %p44 = scmp.eq.s32.totalorder 0, 0
    // Predicated region
    $region18: #{tpu_custom_call.1} parent=1 // pred_check
      %p45 = pneg %p44
    $region19: #{tpu_custom_call.1} parent=1 // pred_check_branch
      %47 = sbr.rel (%p45) target = $region21
    $region20: #{tpu_custom_call.1} parent=1 // pred_region
      %v48 = vlaneseq
      %vm49 = vcmp.ge.s32.totalorder %v48, 0
      %vm50 = vcmp.lt.s32.totalorder %v48, 512
      %vm51 = vmand %vm49, %vm50
      %52 = vst.msk [vmem:[#allocation2] sm:$0xf] %vm51, 0.0
    $region21: #{tpu_custom_call.1} parent=1 // pred_fallthru
      _
    %v53 = vld [vmem:[#allocation3] sm:$0xf]
    %s54 = scalar_lea.vmem [#allocation3], 4
    %v55 = vld [vmem:[%s54] sm:$0xf]
    %v56 = vmul.f32 %v53, %v53
    %v57 = vmul.f32 %v55, %v55
    %v58 = vadd.f32 %v56, %v57
    %v59 = vrsqrt.pop %v58
    %v60 = vmul.f32 %v59, %v58
    %v61 = vmul.f32 %v60, %v59
    %v62 = vmul.f32 0.5, %v61
    %v63 = vsub.f32 1.5, %v62
    %v64 = vmul.f32 %v59, %v63
    %v65 = vmul.f32 %v58, %v64
    %vm66 = vcmp.eq.f32.partialorder %v58, inf
    %v67 = vsel %vm66, %v58, %v65
    %vm68 = vcmp.eq.f32.partialorder %v58, 0.0
    %v69 = vand.u32 %v58, 2147483648
    %v70 = vsel %vm68, %v69, %v67
    %v71 = vand.u32 2147483647, %v53
    %v72 = vsub.f32 %v71, 2.0
    %v73 = vmul.f32 %v72, %v72
    %v74 = vmul.f32 %v73, -0.78125
    %v75 = vmul.f32 %v71, -6.25
    %v76 = vmul.f32 %v75, 1.442695
    %v77 = vpow.pop %v76
    %v78 = vadd.f32 %v77, 1.0
    %v79 = vlog2.pop %v78
    %v80 = vmul.f32 %v79, 0.6931472
    %v81 = vadd.f32 %v74, %v80
    %v82 = vsub.f32 %v70, 4.0
    %v83 = vmul.f32 %v82, %v82
    %v84 = vmul.f32 %v83, 3.125
    %v85 = vsub.f32 %v84, %v81
    %v86 = vsub.f32 0.0, %v85
    %v87 = vmax.f32 %v86, -16.118095
    %v88 = vsub.f32 %v86, -16.118095
    %v89 = vand.u32 2147483647, %v88
    %v90 = vsub.f32 0.0, %v89
    %v91 = vmul.f32 %v90, 1.442695
    %v92 = vpow.pop %v91
    %v93 = vadd.f32 %v92, 1.0
    %v94 = vlog2.pop %v93
    %v95 = vmul.f32 %v94, 0.6931472
    %v96 = vadd.f32 %v87, %v95
    %v97 = vld [vmem:[#allocation6] sm:$0xf]
    %v98 = vld [vmem:[#allocation6 + $0x4] sm:$0xf]
    %v99 = vld [vmem:[#allocation6 + $0x8] sm:$0xf]
    %v100 = vld [vmem:[#allocation6 + $0xc] sm:$0xf]
    %v105 = vperm.slane %v97, 0
    %v106 = vperm.slane %v97, 1
    %v107 = vperm.slane %v97, 2
    %v108 = vperm.slane %v97, 3
    %v109 = vperm.slane %v98, 0
    %v110 = vperm.slane %v98, 1
    %v111 = vperm.slane %v98, 2
    %v112 = vperm.slane %v98, 3
    %v113 = vperm.slane %v99, 0
    %v114 = vperm.slane %v99, 1
    %v115 = vperm.slane %v99, 2
    %v116 = vperm.slane %v99, 3
    %v117 = vperm.slane %v100, 0
    %v118 = vperm.slane %v100, 1
    %v119 = vperm.slane %v100, 2
    %v120 = vperm.slane %v100, 3
    %vm137 = vcmask 1040384
    %v138 = vsel %vm137, %v105, 0.0
    %v139 = vsel %vm137, %v109, 0.0
    %v140 = vadd.f32 %v138, %v139
    %v141 = vsel %vm137, %v113, 0.0
    %v142 = vadd.f32 %v140, %v141
    %v143 = vsel %vm137, %v117, 0.0
    %v144 = vadd.f32 %v142, %v143
    %v145 = vsel %vm137, %v106, 0.0
    %v146 = vsel %vm137, %v110, 0.0
    %v147 = vadd.f32 %v145, %v146
    %v148 = vsel %vm137, %v114, 0.0
    %v149 = vadd.f32 %v147, %v148
    %v150 = vsel %vm137, %v118, 0.0
    %v151 = vadd.f32 %v149, %v150
    %v152 = vsel %vm137, %v107, 0.0
    %v153 = vsel %vm137, %v111, 0.0
    %v154 = vadd.f32 %v152, %v153
    %v155 = vsel %vm137, %v115, 0.0
    %v156 = vadd.f32 %v154, %v155
    %v157 = vsel %vm137, %v119, 0.0
    %v158 = vadd.f32 %v156, %v157
    %v159 = vsel %vm137, %v108, 0.0
    %v160 = vsel %vm137, %v112, 0.0
    %v161 = vadd.f32 %v159, %v160
    %v162 = vsel %vm137, %v116, 0.0
    %v163 = vadd.f32 %v161, %v162
    %v164 = vsel %vm137, %v120, 0.0
    %v165 = vadd.f32 %v163, %v164
    %v166 = vsub.f32 0.0, %v144
    %v167 = vsub.f32 0.0, %v151
    %v168 = vsub.f32 0.0, %v158
    %v169 = vsub.f32 0.0, %v165
    %v171 = vperm.slane %v96, 0
    %v172 = vperm.slane %v96, 1
    %v173 = vperm.slane %v96, 2
    %v174 = vperm.slane %v96, 3
    %v179 = vsub.f32 %v166, %v171
    %v180 = vsub.f32 %v167, %v172
    %v181 = vsub.f32 %v168, %v173
    %v182 = vsub.f32 %v169, %v174
    // Predicated region
    $region22: #{tpu_custom_call.1} parent=1 // pred_check
      %p183 = pneg %p44
    $region23: #{tpu_custom_call.1} parent=1 // pred_check_branch
      %185 = sbr.rel (%p183) target = $region25
    $region24: #{tpu_custom_call.1} parent=1 // pred_region
      %v186 = vlaneseq
      %v187 = vshrl.u32 %v186, 7
      %v188 = vlaneseq
      %v189 = vand.u32 %v188, 127
      %v190 = vadd.s32 %v189, 128
      %v191 = vadd.s32 %v189, 256
      %v192 = vadd.s32 %v189, 384
      %v193 = vstv 0
      %v194 = vadd.s32 %v193, %v187
      %v195 = vmul.u32 %v194, 512
      %v196 = vadd.s32 %v195, %v189
      %v197 = vadd.s32 %v195, %v190
      %v198 = vadd.s32 %v195, %v191
      %v199 = vadd.s32 %v195, %v192
      %v200 = vld [vmem:[#allocation2] sm:$0xf]
      %vm201 = vcmp.lt.s32.totalorder %v196, 64
      %vm202 = vcmp.lt.s32.totalorder %v197, 64
      %vm203 = vcmp.lt.s32.totalorder %v198, 64
      %vm204 = vcmp.lt.s32.totalorder %v199, 64
      %v205 = vsel %vm201, %v179, 0.0
      %v206 = vsel %vm202, %v180, 0.0
      %v207 = vsel %vm203, %v181, 0.0
      %v208 = vsel %vm204, %v182, 0.0
      %v209 = vadd.f32 %v205, 0.0
      %v210 = vadd.f32 %v206, 0.0
      %v211 = vadd.f32 %v207, 0.0
      %v212 = vadd.f32 %v208, 0.0
      %v217 = vrot.slane %v210, 7
      %v218 = vrot.slane %v211, 6
      %v219 = vrot.slane %v212, 5
      %v220 = vsel %vm137, %v209, %v217
      %vm221 = vcmask 1042434
      %v222 = vsel %vm221, %v218, %v219
      %vm223 = vcmask 1041408
      %v224 = vsel %vm223, %v220, %v222
      %v226 = vadd.f32 %v200, %v224
      %v227 = vlaneseq
      %vm228 = vcmp.ge.s32.totalorder %v227, 0
      %vm229 = vcmp.lt.s32.totalorder %v227, 512
      %vm230 = vmand %vm228, %vm229
      %231 = vst.msk [vmem:[#allocation2] sm:$0xf] %vm230, %v226
    $region25: #{tpu_custom_call.1} parent=1 // pred_fallthru
      _
    %p232 = scmp.lt.s32.totalorder 0, 0
    // Predicated region
    $region26: #{tpu_custom_call.1} parent=1 // pred_check
      %p233 = pneg %p232
    $region27: #{tpu_custom_call.1} parent=1 // pred_check_branch
      %235 = sbr.rel (%p233) target = $region29
    $region28: #{tpu_custom_call.1} parent=1 // pred_region
      %v236 = vld [vmem:[#allocation2] sm:$0xf]
      %v237 = vadd.f32 %v179, 0.0
      %v238 = vadd.f32 %v180, 0.0
      %v239 = vadd.f32 %v181, 0.0
      %v240 = vadd.f32 %v182, 0.0
      %v245 = vrot.slane %v238, 7
      %v246 = vrot.slane %v239, 6
      %v247 = vrot.slane %v240, 5
      %v248 = vsel %vm137, %v237, %v245
      %vm249 = vcmask 1042434
      %v250 = vsel %vm249, %v246, %v247
      %vm251 = vcmask 1041408
      %v252 = vsel %vm251, %v248, %v250
      %v254 = vadd.f32 %v236, %v252
      %v255 = vlaneseq
      %vm256 = vcmp.ge.s32.totalorder %v255, 0
      %vm257 = vcmp.lt.s32.totalorder %v255, 512
      %vm258 = vmand %vm256, %vm257
      %259 = vst.msk [vmem:[#allocation2] sm:$0xf] %vm258, %v254
    $region29: #{tpu_custom_call.1} parent=1 // pred_fallthru
      _
    // Predicated region
    $region30: #{tpu_custom_call.1} parent=1 // pred_check
      %p260 = pneg %p44
    $region31: #{tpu_custom_call.1} parent=1 // pred_check_branch
      %262 = sbr.rel (%p260) target = $region33
    $region32: #{tpu_custom_call.1} parent=1 // pred_region
      %v263 = vld [vmem:[#allocation2] sm:$0xf]
      %v265 = vperm.slane %v263, 0
      %v266 = vperm.slane %v263, 1
      %v267 = vperm.slane %v263, 2
      %v268 = vperm.slane %v263, 3
      %v273 = vsel %vm137, %v265, 0.0
      %v274 = vsel %vm137, %v266, 0.0
      %v275 = vadd.f32 %v273, %v274
      %v276 = vsel %vm137, %v267, 0.0
      %v277 = vadd.f32 %v275, %v276
      %v278 = vsel %vm137, %v268, 0.0
      %v279 = vadd.f32 %v277, %v278
      %280 = vadd.xlane.f32.xlu0 %v279
      %v281 = vpop.xlane.xlu0 %280
      %v282 = vrot.slane %v281, 4
      %v283 = vadd.f32 %v281, %v282
      %v284 = vrot.slane %v283, 2
      %v285 = vadd.f32 %v283, %v284
      %v286 = vrot.slane %v285, 1
      %v287 = vadd.f32 %v285, %v286
      %s288 = vtos %v287
      %v289 = vstv %s288
      %290 = vst [vmem:[#allocation8] sm:$0xff] %v289
    $region33: #{tpu_custom_call.1} parent=1 // pred_fallthru
      _
    // Predicated region
    $region34: #{tpu_custom_call.1} parent=1 // pred_check
      _
    $region35: #{tpu_custom_call.1} parent=1 // pred_check_branch
      %292 = sbr.rel (0) target = $region37
    $region36: #{tpu_custom_call.1} parent=1 // pred_region
      %294 = vsyncadd [#allocation5], 0
      %s296 = sshll.u32 [#allocation8], 4
      %s297 = int_to_ptr.vmem [resolvable:$true] %s296
      %s298 = sshll.u32 %s2, 4
      %s299 = int_to_ptr.hbm [resolvable:$true] %s298
      %301 = dma.vmem_to_hbm [thread:$0]  %s297, 128, %s299, [#allocation5]
    $region37: #{tpu_custom_call.1} parent=1 // pred_fallthru
      _
    // Predicated region
    $region38: #{tpu_custom_call.1} parent=1 // pred_check
      _
    $region39: #{tpu_custom_call.1} parent=1 // pred_check_branch
      %303 = sbr.rel (0) target = $region41
    $region40: #{tpu_custom_call.1} parent=1 // pred_region
      %305 = dma.done [#allocation5], 128
    $region41: #{tpu_custom_call.1} parent=1 // pred_fallthru
      _
    %306 = vsyncpa [#allocation4], 1
    %307 = vsyncpa [#allocation7], 1
    %308 = vsyncpa [#allocation5], 1

</llo_original>
